<compile_context>
chip_gen: v7x
topology: tpu7x:2x2x1
jax: 0.10.0
libtpu: 0.0.40
codegen_flags: <defaults>
</compile_context>

<pallas_src>
import itertools
from functools import partial

import numpy as np
import jax
import jax.numpy as jnp
from jax.experimental import pallas as pl
from jax.experimental.pallas import tpu as pltpu

_ROW_TILE = 512          # >=256 keeps v6e/v7x 2x256^2 MXU busy; adaptive for tiny inputs
_LANE = 128


def _round_up(x, m):
    return ((x + m - 1) // m) * m


def _rup(c):
    return _round_up(c, _LANE)


def _default_vmem_limit():
    # Right-sized scoped-VMEM limit; v7x has only 64 MiB per TensorCore.
    try:
        cap = pltpu.get_tpu_info().vmem_capacity_bytes
    except Exception:
        cap = 64 * 1024 * 1024
    return int(min(48 * 1024 * 1024, (cap * 3) // 4))


_VMEM_LIMIT = _default_vmem_limit()


# ----------------------------------------------------------------------------
# Pallas kernels
# ----------------------------------------------------------------------------
def _matmul_bias_act_kernel(x_ref, w_ref, b_ref, o_ref, *, act, slope):
    # bf16 x / w, f32 accumulation, f32 bias + activation epilogue.
    y = jnp.dot(x_ref[...], w_ref[...], preferred_element_type=jnp.float32)
    y = y + b_ref[...]
    if act == "relu":
        y = jnp.maximum(y, 0.0)
    elif act == "leaky":
        y = jnp.where(y >= 0.0, y, slope * y)
    o_ref[...] = y


def _affine_act_kernel(x_ref, s_ref, t_ref, o_ref, *, act, slope):
    y = x_ref[...] * s_ref[...] + t_ref[...]
    if act == "relu":
        y = jnp.maximum(y, 0.0)
    elif act == "leaky":
        y = jnp.where(y >= 0.0, y, slope * y)
    o_ref[...] = y


def pallas_linear(x, w, b, act="none", slope=0.01):
    """y = act(x @ w + b). bf16 operands, f32 accumulation, row-tiled on the MXU."""
    x = jnp.asarray(x)
    w = jnp.asarray(w)
    n, cin = x.shape
    cout = w.shape[1]
    xb = x.astype(jnp.bfloat16)
    wb = w.astype(jnp.bfloat16)
    bf = jnp.asarray(b, jnp.float32).reshape(1, cout)
    tile = min(_ROW_TILE, _round_up(max(n, 1), 8))
    return pl.pallas_call(
        partial(_matmul_bias_act_kernel, act=act, slope=slope),
        out_shape=jax.ShapeDtypeStruct((n, cout), jnp.float32),
        grid=(pl.cdiv(n, tile),),
        in_specs=[
            pl.BlockSpec((tile, cin), lambda i: (i, 0)),
            pl.BlockSpec((cin, cout), lambda i: (0, 0)),
            pl.BlockSpec((1, cout), lambda i: (0, 0)),
        ],
        out_specs=pl.BlockSpec((tile, cout), lambda i: (i, 0)),
        compiler_params=pltpu.CompilerParams(
            dimension_semantics=("parallel",), vmem_limit_bytes=_VMEM_LIMIT),
    )(xb, wb, bf)


def pallas_affine_act(x, scale, shift, act="none", slope=0.01):
    """Fused per-channel affine (folded BatchNorm) + activation, row-tiled (f32 VPU path)."""
    x = jnp.asarray(x, jnp.float32)
    n, c = x.shape
    tile = min(_ROW_TILE, _round_up(max(n, 1), 8))
    return pl.pallas_call(
        partial(_affine_act_kernel, act=act, slope=slope),
        out_shape=jax.ShapeDtypeStruct((n, c), jnp.float32),
        grid=(pl.cdiv(n, tile),),
        in_specs=[
            pl.BlockSpec((tile, c), lambda i: (i, 0)),
            pl.BlockSpec((1, c), lambda i: (0, 0)),
            pl.BlockSpec((1, c), lambda i: (0, 0)),
        ],
        out_specs=pl.BlockSpec((tile, c), lambda i: (i, 0)),
        compiler_params=pltpu.CompilerParams(
            dimension_semantics=("parallel",), vmem_limit_bytes=_VMEM_LIMIT),
    )(x,
      jnp.asarray(scale, jnp.float32).reshape(1, c),
      jnp.asarray(shift, jnp.float32).reshape(1, c))


# ----------------------------------------------------------------------------
# BatchNorm helpers (training-mode batch statistics, folded into scale/shift)
# ----------------------------------------------------------------------------
def _bn_scale_shift(x, gamma, beta, eps=1e-5):
    x = jnp.asarray(x, jnp.float32)
    mean = jnp.mean(x, axis=0)
    var = jnp.mean(jnp.square(x - mean), axis=0)   # biased variance (torch training BN)
    scale = gamma / jnp.sqrt(var + eps)
    shift = beta - mean * scale
    return scale, shift


def bn_then_act(x, gamma, beta, act, slope=0.01):
    s, t = _bn_scale_shift(x, gamma, beta)
    return pallas_affine_act(x, s, t, act=act, slope=slope)


def bn_affine(x, gamma, beta):
    # ResBlock pattern: x is already act(conv(.)) (activation fused into the matmul), so
    # this is just BatchNorm(act(x)) with stats taken on the activated values.
    s, t = _bn_scale_shift(x, gamma, beta)
    return pallas_affine_act(x, s, t, act="none")


# ----------------------------------------------------------------------------
# Channel padding
# ----------------------------------------------------------------------------
def _pad_channels(x):
    x = jnp.asarray(x, jnp.float32)
    n, c = x.shape
    cp = _rup(c)
    if cp == c:
        return x
    return jnp.concatenate([x, jnp.zeros((n, cp - c), jnp.float32)], axis=1)


# ----------------------------------------------------------------------------
# Sparse tensor glue (vectorized coordinate hashing, voxelize / devoxelize, kernel maps)
# ----------------------------------------------------------------------------
_HS = 1 << 15   # coordinate shift so negative offsets hash correctly


def _hash_coords(c):
    c = np.asarray(c, np.int64)
    return ((c[:, 3] << 48) | ((c[:, 0] + _HS) << 32)
            | ((c[:, 1] + _HS) << 16) | (c[:, 2] + _HS))


def _coord_index(coords):
    keys = _hash_coords(coords)
    order = np.argsort(keys, kind="stable").astype(np.int64)
    return keys[order], order


def _lookup_coords(table, query_coords):
    skeys, order = table
    q = _hash_coords(query_coords)
    pos = np.searchsorted(skeys, q)
    pos = np.minimum(pos, len(skeys) - 1)
    hit = skeys[pos] == q
    return np.where(hit, order[pos], -1)


def segment_mean(feats, idx, num_segments):
    feats = jnp.asarray(feats, jnp.float32)
    idx = np.asarray(idx).reshape(-1)
    valid = (idx >= 0)
    safe = np.where(valid, idx, 0)
    w = jnp.asarray(valid.astype(np.float32))
    sums = jnp.zeros((num_segments, feats.shape[1]), jnp.float32).at[safe].add(feats * w[:, None])
    cnts = jnp.zeros((num_segments,), jnp.float32).at[safe].add(w)
    return sums / jnp.maximum(cnts, 1.0)[:, None]


def initial_voxelize(feats, coords_int):
    uniq, inv = np.unique(coords_int, axis=0, return_inverse=True)
    inv = np.asarray(inv).reshape(-1)
    vf = segment_mean(feats, inv, uniq.shape[0])
    return vf, uniq.astype(np.int64)


def _offsets(ksize):
    rngs = []
    for k in ksize:
        rngs.append(list(range(-(k // 2), k // 2 + 1)) if k > 1 else [0])
    return list(itertools.product(*rngs))


def _downsample_coords(coords, stride_vec, conv_stride):
    ds = np.asarray(stride_vec, np.int64) * np.asarray(conv_stride, np.int64)
    dc = np.asarray(coords, np.int64).copy()
    dc[:, :3] = (dc[:, :3] // ds) * ds
    uniq = np.unique(dc, axis=0)
    # batch-major ordering (primary key = batch), so C[-1, batch] == batch_size - 1
    order = np.lexsort((uniq[:, 2], uniq[:, 1], uniq[:, 0], uniq[:, 3]))
    return uniq[order]


def build_kernel_map(in_table, out_coords, stride_vec, kernel_size):
    """Vectorized torchsparse rulebook: neighbor index per (output voxel, kernel offset)."""
    offs = np.asarray(_offsets(kernel_size), np.int64)             # [K, 3]
    oc = np.asarray(out_coords, np.int64)
    m, k = oc.shape[0], offs.shape[0]
    sv = np.asarray(stride_vec, np.int64)
    q_xyz = oc[:, None, :3] + offs[None, :, :] * sv[None, None, :]
    q_b = np.broadcast_to(oc[:, None, 3:4], (m, k, 1))
    qc = np.concatenate([q_xyz, q_b], axis=-1).reshape(m * k, 4)
    return _lookup_coords(in_table, qc).reshape(m, k)


def sparse_conv_apply(feats, nbr, w, act="none", slope=0.01):
    """Sparse Conv3d: gather kernel neighborhood (zero row for misses) -> one Pallas matmul,
    with the following LeakyReLU (if any) fused into the matmul epilogue."""
    feats = jnp.asarray(feats, jnp.float32)
    n, cin = feats.shape
    m, k = nbr.shape
    cout = w.shape[-1]
    feats_bf = jnp.concatenate(
        [feats.astype(jnp.bfloat16), jnp.zeros((1, cin), jnp.bfloat16)], axis=0)
    gi = jnp.asarray(np.where(nbr >= 0, nbr, n), jnp.int32)
    flat = feats_bf[gi].reshape(m, k * cin)                         # [M, K*Cin] bf16
    w_flat = jnp.asarray(w, jnp.float32).reshape(k * cin, cout)
    return pallas_linear(flat, w_flat, jnp.zeros((cout,), jnp.float32), act=act, slope=slope)


def voxel_to_point(vox_f, vox_c, stride_vec, pt_c_float):
    """Trilinear devoxelization (nearest=False); vectorized host-side index build."""
    s = np.asarray(stride_vec, np.float64)
    p = np.asarray(pt_c_float[:, :3], np.float64)
    b = np.asarray(pt_c_float[:, 3]).astype(np.int64)
    base = np.floor(p / s) * s
    frac = (p - base) / s
    n_pts = p.shape[0]
    corners = np.asarray(list(itertools.product((0, 1), repeat=3)), np.int64)    # [8, 3]
    cc = (base[None, :, :] + corners[:, None, :] * s[None, None, :]).astype(np.int64)
    qb = np.broadcast_to(b[None, :, None], (8, n_pts, 1))
    qc = np.concatenate([cc, qb], axis=-1).reshape(8 * n_pts, 4)
    idxs = _lookup_coords(_coord_index(vox_c), qc).reshape(8, n_pts)
    w = np.ones((8, n_pts), np.float64)
    for d in range(3):
        fd = frac[:, d][None, :]
        w = w * np.where(corners[:, d][:, None] == 1, fd, 1.0 - fd)
    w = np.where(idxs >= 0, w, 0.0)
    w = w / (w.sum(axis=0, keepdims=True) + 1e-8)
    vf = jnp.asarray(vox_f, jnp.float32)
    out = jnp.zeros((n_pts, vf.shape[1]), jnp.float32)
    for kk in range(8):
        gi = jnp.asarray(np.where(idxs[kk] >= 0, idxs[kk], 0), jnp.int32)
        out = out + jnp.asarray(w[kk], jnp.float32)[:, None] * vf[gi]
    return out


def point_to_voxel(vox_c, stride_vec, pt_f, pt_c_float):
    """Average point features into the voxel tensor's coordinate set."""
    s = np.asarray(stride_vec, np.float64)
    keyc = (np.floor(np.asarray(pt_c_float[:, :3], np.float64) / s) * s).astype(np.int64)
    b = np.asarray(pt_c_float[:, 3]).astype(np.int64)
    qc = np.concatenate([keyc, b[:, None]], axis=-1)
    idx = _lookup_coords(_coord_index(vox_c), qc)
    return segment_mean(pt_f, idx, np.asarray(vox_c).shape[0])


# ----------------------------------------------------------------------------
# Module blocks
# ----------------------------------------------------------------------------
def pp_model(p, x):
    # Fold the leading BatchNorm affine into l1:  (x*s + t) @ W + b == x @ (s[:,None]*W) + (t@W + b)
    s, t = _bn_scale_shift(x, p["bn_in_g"], p["bn_in_b"])
    w1 = p["l1_w"] * s[:, None]
    b1 = p["l1_b"] + t @ p["l1_w"]
    h = pallas_linear(x, w1, b1)
    h = bn_then_act(h, p["bn1_g"], p["bn1_b"], act="relu")
    h = pallas_linear(h, p["l2_w"], p["l2_b"])
    h = bn_then_act(h, p["bn2_g"], p["bn2_b"], act="relu")
    h = pallas_linear(h, p["l3_w"], p["l3_b"])
    h = bn_then_act(h, p["bn3_g"], p["bn3_b"], act="relu")
    h = pallas_linear(h, p["l4_w"], p["l4_b"])
    return h


def point_branch(p, x):
    # nn.LeakyReLU(True) -> negative_slope == 1.0 (identity), reproduced exactly.
    cin, cout = p["cin"], p["cout"]
    h = pallas_linear(x, p["la_w"], p["la_b"])
    h = bn_then_act(h, p["bna_g"], p["bna_b"], act="leaky", slope=1.0)
    h = pallas_linear(h, p["lb_w"], p["lb_b"])
    h = bn_then_act(h, p["bnb_g"], p["bnb_b"], act="leaky", slope=1.0)
    n = h.shape[0]
    pooled = jnp.max(h[:, :cout].reshape(n, cout // 2, 2), axis=-1)   # nn.MaxPool1d(2,2), real chans
    pf = pooled + jnp.asarray(x, jnp.float32)[:, :cin]                # residual (cout//2 == cin)
    pf_pad = jnp.zeros((n, p["up_w"].shape[0]), jnp.float32).at[:, :cout // 2].set(pf)
    return pallas_linear(pf_pad, p["up_w"], p["up_b"])


def res_context_block(p, f, c, stride):
    tbl = _coord_index(c)                     # kernel maps cached and shared across branches
    nbr_13 = build_kernel_map(tbl, c, stride, (1, 3, 3))
    nbr_31 = build_kernel_map(tbl, c, stride, (3, 1, 3))
    sc = sparse_conv_apply(f, nbr_13, p["conv1"], act="leaky")
    sc = bn_affine(sc, p["bn0_g"], p["bn0_b"])
    sc = sparse_conv_apply(sc, nbr_31, p["conv1_2"], act="leaky")
    sc = bn_affine(sc, p["bn0_2_g"], p["bn0_2_b"])
    ra = sparse_conv_apply(f, nbr_31, p["conv2"], act="leaky")
    ra = bn_affine(ra, p["bn1_g"], p["bn1_b"])
    ra = sparse_conv_apply(ra, nbr_13, p["conv3"], act="leaky")
    ra = bn_affine(ra, p["bn2_g"], p["bn2_b"])
    return ra + sc


def res_block(p, f, c, stride, pool_stride):
    tbl = _coord_index(c)
    nbr_31 = build_kernel_map(tbl, c, stride, (3, 1, 3))
    nbr_13 = build_kernel_map(tbl, c, stride, (1, 3, 3))
    sc = sparse_conv_apply(f, nbr_31, p["conv1"], act="leaky")
    sc = bn_affine(sc, p["bn0_g"], p["bn0_b"])
    sc = sparse_conv_apply(sc, nbr_13, p["conv1_2"], act="leaky")
    sc = bn_affine(sc, p["bn0_2_g"], p["bn0_2_b"])
    ra = sparse_conv_apply(f, nbr_13, p["conv2"], act="leaky")
    ra = bn_affine(ra, p["bn1_g"], p["bn1_b"])
    ra = sparse_conv_apply(ra, nbr_31, p["conv3"], act="leaky")
    ra = bn_affine(ra, p["bn2_g"], p["bn2_b"])
    ra = ra + sc
    out_coords = _downsample_coords(c, stride, pool_stride)
    new_stride = tuple(int(s * cs) for s, cs in zip(stride, pool_stride))
    nbr_pool = build_kernel_map(tbl, out_coords, stride, (3, 3, 3))
    pf = sparse_conv_apply(ra, nbr_pool, p["pool"], act="none")
    return pf, out_coords, new_stride, ra


# ----------------------------------------------------------------------------
# Parameter init (deterministic, synthetic; channel dims padded to multiples of 128)
# ----------------------------------------------------------------------------
def init_params(input_channel, init_size, key):
    keys = iter(jax.random.split(key, 64))

    def lin(cin, cout):
        k1, k2 = jax.random.split(next(keys))
        w = jnp.zeros((_rup(cin), _rup(cout)), jnp.float32)
        w = w.at[:cin, :cout].set(jax.random.normal(k1, (cin, cout), jnp.float32) / np.sqrt(cin))
        b = jnp.zeros((_rup(cout),), jnp.float32)
        b = b.at[:cout].set(0.01 * jax.random.normal(k2, (cout,), jnp.float32))
        return w, b

    def conv(ksz, cin, cout):
        kk = int(np.prod(ksz))
        w = jnp.zeros((kk, _rup(cin), _rup(cout)), jnp.float32)
        w = w.at[:, :cin, :cout].set(
            jax.random.normal(next(keys), (kk, cin, cout), jnp.float32) / np.sqrt(kk * cin))
        return w

    def bn(c):
        return jnp.ones((_rup(c),), jnp.float32), jnp.zeros((_rup(c),), jnp.float32)

    p = {}
    pp = {}
    pp["bn_in_g"], pp["bn_in_b"] = bn(input_channel)
    pp["l1_w"], pp["l1_b"] = lin(input_channel, 32)
    pp["bn1_g"], pp["bn1_b"] = bn(32)
    pp["l2_w"], pp["l2_b"] = lin(32, 64)
    pp["bn2_g"], pp["bn2_b"] = bn(64)
    pp["l3_w"], pp["l3_b"] = lin(64, 128)
    pp["bn3_g"], pp["bn3_b"] = bn(128)
    pp["l4_w"], pp["l4_b"] = lin(128, 256)
    p["PPmodel"] = pp
    p["fea_w"], p["fea_b"] = lin(256, init_size)

    def res_ctx(cin, cout):
        d = {}
        d["conv1"] = conv((1, 3, 3), cin, cout); d["bn0_g"], d["bn0_b"] = bn(cout)
        d["conv1_2"] = conv((3, 1, 3), cout, cout); d["bn0_2_g"], d["bn0_2_b"] = bn(cout)
        d["conv2"] = conv((3, 1, 3), cin, cout); d["bn1_g"], d["bn1_b"] = bn(cout)
        d["conv3"] = conv((1, 3, 3), cout, cout); d["bn2_g"], d["bn2_b"] = bn(cout)
        return d

    def res_blk(cin, cout):
        d = {}
        d["conv1"] = conv((3, 1, 3), cin, cout); d["bn0_g"], d["bn0_b"] = bn(cout)
        d["conv1_2"] = conv((1, 3, 3), cout, cout); d["bn0_2_g"], d["bn0_2_b"] = bn(cout)
        d["conv2"] = conv((1, 3, 3), cin, cout); d["bn1_g"], d["bn1_b"] = bn(cout)
        d["conv3"] = conv((3, 1, 3), cout, cout); d["bn2_g"], d["bn2_b"] = bn(cout)
        d["pool"] = conv((3, 3, 3), cout, cout)
        return d

    def pbd(cin, cout):
        mid = int(cin + (cout - cin) // 2)
        d = {"cin": cin, "mid": mid, "cout": cout}
        d["la_w"], d["la_b"] = lin(cin, mid); d["bna_g"], d["bna_b"] = bn(mid)
        d["lb_w"], d["lb_b"] = lin(mid, cout); d["bnb_g"], d["bnb_b"] = bn(cout)
        d["up_w"], d["up_b"] = lin(cout // 2, cout)
        return d

    p["downCntx"] = res_ctx(init_size, init_size)
    p["resBlock2"] = res_blk(init_size, 2 * init_size)
    p["resBlock3"] = res_blk(2 * init_size, 4 * init_size)
    p["resBlock4"] = res_blk(4 * init_size, 8 * init_size)
    p["resBlock5"] = res_blk(8 * init_size, 16 * init_size)
    p["PBD1"] = pbd(init_size, 2 * init_size)
    p["PBD2"] = pbd(2 * init_size, 4 * init_size)
    p["PBD3"] = pbd(4 * init_size, 8 * init_size)
    p["PBD4"] = pbd(8 * init_size, 16 * init_size)
    return p


# ----------------------------------------------------------------------------
# PointVoxelEnc forward
# ----------------------------------------------------------------------------
def _to_dense(feats, idx, batch_size, dshape):
    feats = jnp.asarray(feats, jnp.float32)
    dense = jnp.zeros((batch_size, dshape[0], dshape[1], dshape[2], feats.shape[1]), jnp.float32)
    dense = dense.at[idx[:, 0], idx[:, 1], idx[:, 2], idx[:, 3]].set(feats)
    return jnp.transpose(dense, (0, 4, 1, 2, 3))          # [B, C, D0, D1, D2]


def point_voxel_enc_forward(params, voxel_features, coors, batch_size, init_size, spatial_shape):
    # coors comes in as [batch, z, y, x]; torch.flip(dims=[1]) -> [x, y, z, batch]
    coors_np = np.asarray(coors)
    coors_f = coors_np[:, ::-1].astype(np.float64)
    x = _pad_channels(jnp.asarray(voxel_features, jnp.float32))

    feats = pp_model(params["PPmodel"], x)
    init_feat = pallas_linear(feats, params["fea_w"], params["fea_b"], act="leaky", slope=0.01)

    p0_c = coors_f
    p0_f = init_feat

    coords_int = np.floor(coors_f).astype(np.int64)
    v0_f, v0_c = initial_voxelize(p0_f, coords_int)        # init_res == after_res == 0.5
    s0 = (1, 1, 1)

    v0_f = res_context_block(params["downCntx"], v0_f, v0_c, s0)

    d1_f, d1_c, s1, _ = res_block(params["resBlock2"], v0_f, v0_c, s0, (2, 2, 2))
    p1 = point_branch(params["PBD1"], p0_f)
    p1f = voxel_to_point(d1_f, d1_c, s1, p0_c) + p1
    v1_f = point_to_voxel(d1_c, s1, p1f, p0_c)

    d2_f, d2_c, s2, _ = res_block(params["resBlock3"], v1_f, d1_c, s1, (2, 2, 2))
    p2 = point_branch(params["PBD2"], p1f)
    p2f = voxel_to_point(d2_f, d2_c, s2, p0_c) + p2
    v2_f = point_to_voxel(d2_c, s2, p2f, p0_c)

    d3_f, d3_c, s3, _ = res_block(params["resBlock4"], v2_f, d2_c, s2, (2, 2, 1))
    p3 = point_branch(params["PBD3"], p2f)
    p3f = voxel_to_point(d3_f, d3_c, s3, p0_c) + p3
    v3_f = point_to_voxel(d3_c, s3, p3f, p0_c)

    d4_f, d4_c, s4, _ = res_block(params["resBlock5"], v3_f, d3_c, s3, (2, 2, 1))
    p4 = point_branch(params["PBD4"], p3f)
    p4f = voxel_to_point(d4_f, d4_c, s4, p0_c) + p4
    v4_f = point_to_voxel(d4_c, s4, p4f, p0_c)

    maxs = coors_f[:, :3].max(axis=0)

    def remap(cf):
        cc = np.asarray(cf, np.float64).copy()
        for d in range(3):
            cc[:, d] = np.minimum(cc[:, d], maxs[d])
        b = cc[:, 3].copy()
        return np.stack([b,
                         np.floor(cc[:, 0] / 16.0),
                         np.floor(cc[:, 1] / 16.0),
                         np.floor(cc[:, 2] / 4.0)], axis=1).astype(np.int32)

    v4_idx = remap(d4_c.astype(np.float64))
    p4_idx = remap(p0_c)

    batch_size_v = int(v4_idx[-1, 0]) + 1
    assert batch_size_v == batch_size, "batch_size mismatch"

    c_final = 16 * init_size
    dshape = (spatial_shape[0] // 16, spatial_shape[1] // 16, spatial_shape[2] // 4)
    pts_feats = _to_dense(p4f[:, :c_final], p4_idx, batch_size, dshape)
    pts_voxel_feats = _to_dense(v4_f[:, :c_final], v4_idx, batch_size, dshape)
    return pts_voxel_feats, pts_feats


# ----------------------------------------------------------------------------
if __name__ == "__main__":
    input_channel = 4
    init_size = 8
    spatial_shape = (32, 32, 8)
    batch_size = 2
    pts_per_batch = 48
    n = batch_size * pts_per_batch

    key = jax.random.PRNGKey(0)
    kx, ky, kz, kf = jax.random.split(key, 4)
    xs = jax.random.randint(kx, (n,), 0, spatial_shape[0])
    ys = jax.random.randint(ky, (n,), 0, spatial_shape[1])
    zs = jax.random.randint(kz, (n,), 0, spatial_shape[2])
    bs = jnp.repeat(jnp.arange(batch_size), pts_per_batch)
    coors = jnp.stack([bs, zs, ys, xs], axis=1).astype(jnp.int32)   # [batch, z, y, x]
    voxel_features = jax.random.normal(kf, (n, input_channel), jnp.float32)

    params = init_params(input_channel, init_size, jax.random.PRNGKey(42))

    pts_voxel_feats, pts_feats = point_voxel_enc_forward(
        params, voxel_features, coors, batch_size, init_size, spatial_shape)
    pts_voxel_feats = jax.block_until_ready(pts_voxel_feats)
    pts_feats = jax.block_until_ready(pts_feats)

    expected = (batch_size, 16 * init_size,
                spatial_shape[0] // 16, spatial_shape[1] // 16, spatial_shape[2] // 4)
    assert pts_voxel_feats.shape == expected, pts_voxel_feats.shape
    assert pts_feats.shape == expected, pts_feats.shape
    assert np.all(np.isfinite(np.asarray(pts_voxel_feats)))
    assert np.all(np.isfinite(np.asarray(pts_feats)))
    print("KERNEL_OK")
</pallas_src>

<mosaic_0001>
module attributes {stable_mosaic.version = 11 : i64} {
  func.func @_matmul_bias_act_kernel(%arg0: i32, %arg1: memref<96x128xbf16, #tpu.memory_space<vmem>>, %arg2: memref<128x128xbf16, #tpu.memory_space<vmem>>, %arg3: memref<1x128xf32, #tpu.memory_space<vmem>>, %arg4: memref<96x128xf32, #tpu.memory_space<vmem>>) attributes {dimension_semantics = [#tpu.dimension_semantics<parallel>], iteration_bounds = array<i64: 1>, scalar_prefetch = 0 : i64, scratch_operands = 0 : i64, tpu.core_type = #tpu.core_type<tc>, window_params = [{transform_indices = @transform_0, window_bounds = array<i64: 96, 128>}, {pipeline_mode = #tpu.pipeline_mode<synchronous>, transform_indices = @transform_1, window_bounds = array<i64: 128, 128>}, {pipeline_mode = #tpu.pipeline_mode<synchronous>, transform_indices = @transform_2, window_bounds = array<i64: 1, 128>}, {transform_indices = @transform_3, window_bounds = array<i64: 96, 128>}]} {
    %c0 = arith.constant 0 : index
    %c0_0 = arith.constant 0 : index
    %0 = vector.load %arg1[%c0, %c0_0] : memref<96x128xbf16, #tpu.memory_space<vmem>>, vector<96x128xbf16>
    %c0_1 = arith.constant 0 : index
    %c0_2 = arith.constant 0 : index
    %1 = vector.load %arg2[%c0_1, %c0_2] : memref<128x128xbf16, #tpu.memory_space<vmem>>, vector<128x128xbf16>
    %cst = arith.constant dense<0.000000e+00> : vector<96x128xf32>
    %2 = tpu.matmul %0, %1, %cst {dimension_numbers = #tpu.dot_dimension_numbers<[1], [0], [0], [1], [0, 0, 1, 1], [], []>} : vector<96x128xbf16>, vector<128x128xbf16>, vector<96x128xf32> -> vector<96x128xf32>
    %c0_3 = arith.constant 0 : index
    %c0_4 = arith.constant 0 : index
    %3 = vector.load %arg3[%c0_3, %c0_4] : memref<1x128xf32, #tpu.memory_space<vmem>>, vector<1x128xf32>
    %4 = vector.broadcast %3 : vector<1x128xf32> to vector<96x128xf32>
    %5 = arith.addf %2, %4 : vector<96x128xf32>
    %c0_5 = arith.constant 0 : index
    %c0_6 = arith.constant 0 : index
    %6 = vector.load %arg4[%c0_5, %c0_6] : memref<96x128xf32, #tpu.memory_space<vmem>>, vector<96x128xf32>
    tpu.vector_store %arg4[%c0_5, %c0_6], %5 {strides = array<i32>} : memref<96x128xf32, #tpu.memory_space<vmem>>, vector<96x128xf32>,
    return
  }
  func.func @transform_0(%arg0: i32) -> (i32, i32) {
    %c0_i32 = arith.constant 0 : i32
    %c0_i32_0 = arith.constant 0 : i32
    return %arg0, %c0_i32 : i32, i32
  }
  func.func @transform_1(%arg0: i32) -> (i32, i32) {
    %c0_i32 = arith.constant 0 : i32
    %c0_i32_0 = arith.constant 0 : i32
    %c0_i32_1 = arith.constant 0 : i32
    return %c0_i32, %c0_i32_0 : i32, i32
  }
  func.func @transform_2(%arg0: i32) -> (i32, i32) {
    %c0_i32 = arith.constant 0 : i32
    %c0_i32_0 = arith.constant 0 : i32
    %c0_i32_1 = arith.constant 0 : i32
    return %c0_i32, %c0_i32_0 : i32, i32
  }
  func.func @transform_3(%arg0: i32) -> (i32, i32) {
    %c0_i32 = arith.constant 0 : i32
    %c0_i32_0 = arith.constant 0 : i32
    return %arg0, %c0_i32 : i32, i32
  }
}

</mosaic_0001>

<llo_original>
// kernel: tpu_custom_call.1
$region0: #{tpu_custom_call.1}
  #allocation0 [shape = 'u32[]', space=smem, size = 0x4, offset = 0x4, fixed_abs, tag = 'smem constant byte address 0x4 - core index']
  #allocation1 [shape = 'u32[144,128]{1,0:T(1,128)}', space=vmem, size = 0x12000, scoped, tag = 'internal scratch']
  %s0 = inlined_call_operand.hbm [shape: bf16[96,128], index: 0, kind: input, shape index: {}]
  %s1 = inlined_call_operand.hbm [shape: bf16[128,128], index: 1, kind: input, shape index: {}]
  %s2 = inlined_call_operand.vmem [shape: f32[1,128], index: 2, kind: input, shape index: {}]
  %s3 = inlined_call_operand.hbm [shape: f32[96,128], index: 3, kind: output, shape index: {}]
  %s4 = sld [smem:[#allocation0]]
  $region30: #{tpu_custom_call.1} parent=0
    _
  %s6 = ssub.s32 1, %s4
  %s7 = scalar_select 0, %s6, %s4
  $region1: #{tpu_custom_call.1} parent=0
    #allocation2 [shape = 'u8[24576]{0}', space=vmem, size = 0x6000, scoped, tag = 'input window, operand 0, single buffered']
    #allocation3 [shape = 's32[1]{0}', space=sflag, size = 0x4, scoped, tag = 'scoped memory for tpu_custom_call.1']
    #allocation4 [shape = 's32[1]{0}', space=sflag, size = 0x4, scoped, tag = 'scoped memory for tpu_custom_call.1']
    #allocation5 [shape = 'u8[32768]{0}', space=vmem, size = 0x8000, scoped, tag = 'input window, operand 1, single buffered']
    #allocation6 [shape = 's32[1]{0}', space=sflag, size = 0x4, scoped, tag = 'scoped memory for tpu_custom_call.1']
    #allocation7 [shape = 'u8[49152]{0}', space=vmem, size = 0xc000, scoped, tag = 'output window, operand 0, single buffered']
    %8 = vsyncpa [#allocation3], 0
    %9 = vsyncpa [#allocation6], 0
    %10 = vsyncpa [#allocation4], 0
    // Predicated region
    $region2: #{tpu_custom_call.1} parent=1 // pred_check
      _
    $region3: #{tpu_custom_call.1} parent=1 // pred_check_branch
      %12 = sbr.rel (0) target = $region5
    $region4: #{tpu_custom_call.1} parent=1 // pred_region
      %s14 = ssub.s32 768, 768
      %15 = vsyncadd [#allocation3], %s14
      %s16 = sshll.u32 [#allocation2], 4
      %s17 = int_to_ptr.vmem [resolvable:$true] %s16
      %22 = dma.hbm_to_vmem [thread:$0]  %s0, 768, %s17, [#allocation3], 64, 64, 4
    $region5: #{tpu_custom_call.1} parent=1 // pred_fallthru
      _
    // Predicated region
    $region6: #{tpu_custom_call.1} parent=1 // pred_check
      _
    $region7: #{tpu_custom_call.1} parent=1 // pred_check_branch
      %24 = sbr.rel (0) target = $region9
    $region8: #{tpu_custom_call.1} parent=1 // pred_region
      %s26 = ssub.s32 1024, 1024
      %27 = vsyncadd [#allocation6], %s26
      %s28 = sshll.u32 [#allocation5], 4
      %s29 = int_to_ptr.vmem [resolvable:$true] %s28
      %34 = dma.hbm_to_vmem [thread:$0]  %s1, 1024, %s29, [#allocation6], 64, 64, 4
    $region9: #{tpu_custom_call.1} parent=1 // pred_fallthru
      _
    // Predicated region
    $region10: #{tpu_custom_call.1} parent=1 // pred_check
      _
    $region11: #{tpu_custom_call.1} parent=1 // pred_check_branch
      %36 = sbr.rel (0) target = $region13
    $region12: #{tpu_custom_call.1} parent=1 // pred_region
      _
    $region13: #{tpu_custom_call.1} parent=1 // pred_fallthru
      _
    // Predicated region
    $region14: #{tpu_custom_call.1} parent=1 // pred_check
      _
    $region15: #{tpu_custom_call.1} parent=1 // pred_check_branch
      %38 = sbr.rel (0) target = $region17
    $region16: #{tpu_custom_call.1} parent=1 // pred_region
      %39 = dma.done [#allocation3], 768
    $region17: #{tpu_custom_call.1} parent=1 // pred_fallthru
      _
    // Predicated region
    $region18: #{tpu_custom_call.1} parent=1 // pred_check
      _
    $region19: #{tpu_custom_call.1} parent=1 // pred_check_branch
      %41 = sbr.rel (0) target = $region21
    $region20: #{tpu_custom_call.1} parent=1 // pred_region
      %42 = dma.done [#allocation6], 1024
    $region21: #{tpu_custom_call.1} parent=1 // pred_fallthru
      _
    %v44 = vld [vmem:[#allocation2] sm:$0xf]
    %v45 = vld [vmem:[#allocation2 + $0x4] sm:$0xf]
    %v46 = vld [vmem:[#allocation2 + $0x8] sm:$0xf]
    %v47 = vld [vmem:[#allocation2 + $0xc] sm:$0xf]
    %v48 = vld [vmem:[#allocation2 + $0x10] sm:$0xf]
    %v49 = vld [vmem:[#allocation2 + $0x14] sm:$0xf]
    %v50 = vld [vmem:[#allocation2 + $0x18] sm:$0xf]
    %v51 = vld [vmem:[#allocation2 + $0x1c] sm:$0xf]
    %v52 = vld [vmem:[#allocation2 + $0x20] sm:$0xf]
    %v53 = vld [vmem:[#allocation2 + $0x24] sm:$0xf]
    %v54 = vld [vmem:[#allocation2 + $0x28] sm:$0xf]
    %v55 = vld [vmem:[#allocation2 + $0x2c] sm:$0xf]
    %v56 = vld [vmem:[#allocation5] sm:$0xf]
    %v57 = vld [vmem:[#allocation5 + $0x4] sm:$0xf]
    %v58 = vld [vmem:[#allocation5 + $0x8] sm:$0xf]
    %v59 = vld [vmem:[#allocation5 + $0xc] sm:$0xf]
    %v60 = vld [vmem:[#allocation5 + $0x10] sm:$0xf]
    %v61 = vld [vmem:[#allocation5 + $0x14] sm:$0xf]
    %v62 = vld [vmem:[#allocation5 + $0x18] sm:$0xf]
    %v63 = vld [vmem:[#allocation5 + $0x1c] sm:$0xf]
    %v64 = vld [vmem:[#allocation5 + $0x20] sm:$0xf]
    %v65 = vld [vmem:[#allocation5 + $0x24] sm:$0xf]
    %v66 = vld [vmem:[#allocation5 + $0x28] sm:$0xf]
    %v67 = vld [vmem:[#allocation5 + $0x2c] sm:$0xf]
    %v68 = vld [vmem:[#allocation5 + $0x30] sm:$0xf]
    %v69 = vld [vmem:[#allocation5 + $0x34] sm:$0xf]
    %v70 = vld [vmem:[#allocation5 + $0x38] sm:$0xf]
    %v71 = vld [vmem:[#allocation5 + $0x3c] sm:$0xf]
    %v72 = vld [vmem:[%s2] sm:$0x1]
    %v74 = vlaneseq
    %v75 = vshrl.u32 %v74, 7
    %v76 = vsub.s32 0, %v75
    %v77 = vrot.slane %v72, %v76
    %v91 = vunpack.c.l.b16 %v44
    %v92 = vunpack.c.l.b16 %v45
    %v93 = vunpack.c.l.b16 %v46
    %v94 = vunpack.c.l.b16 %v47
    %v95 = vunpack.c.l.b16 %v48
    %v96 = vunpack.c.l.b16 %v49
    %v97 = vunpack.c.l.b16 %v50
    %v98 = vunpack.c.l.b16 %v51
    %v99 = vunpack.c.l.b16 %v52
    %v100 = vunpack.c.l.b16 %v53
    %v101 = vunpack.c.l.b16 %v54
    %v102 = vunpack.c.l.b16 %v55
    %v103 = vpack.c.b16 %v92, %v91
    %v104 = vpack.c.b16 %v94, %v93
    %v105 = vpack.c.b16 %v96, %v95
    %v106 = vpack.c.b16 %v98, %v97
    %v107 = vpack.c.b16 %v100, %v99
    %v108 = vpack.c.b16 %v102, %v101
    %v131 = vunpack.c.l.b16 %v56
    %v132 = vunpack.c.l.b16 %v57
    %v133 = vunpack.c.l.b16 %v58
    %v134 = vunpack.c.l.b16 %v59
    %v135 = vunpack.c.l.b16 %v60
    %v136 = vunpack.c.l.b16 %v61
    %v137 = vunpack.c.l.b16 %v62
    %v138 = vunpack.c.l.b16 %v63
    %v139 = vunpack.c.l.b16 %v64
    %v140 = vunpack.c.l.b16 %v65
    %v141 = vunpack.c.l.b16 %v66
    %v142 = vunpack.c.l.b16 %v67
    %v143 = vunpack.c.l.b16 %v68
    %v144 = vunpack.c.l.b16 %v69
    %v145 = vunpack.c.l.b16 %v70
    %v146 = vunpack.c.l.b16 %v71
    %v147 = vpack.c.b16 %v132, %v131
    %v148 = vpack.c.b16 %v134, %v133
    %v149 = vpack.c.b16 %v136, %v135
    %v150 = vpack.c.b16 %v138, %v137
    %v151 = vpack.c.b16 %v140, %v139
    %v152 = vpack.c.b16 %v142, %v141
    %v153 = vpack.c.b16 %v144, %v143
    %v154 = vpack.c.b16 %v146, %v145
    %163 = vmatprep.subr.bf16.mxu0 0
    %164 = vmatpush1.bf16.msra.mxu0 %v147
    %165 = vmatprep.subr.bf16.mxu0 0
    %166 = vmatpush1.bf16.msra.mxu0 %v148
    %167 = vmatprep.subr.bf16.mxu0 0
    %168 = vmatpush1.bf16.msra.mxu0 %v149
    %169 = vmatprep.subr.bf16.mxu0 0
    %170 = vmatpush1.bf16.msra.mxu0 %v150
    %171 = vmatprep.subr.bf16.mxu0 0
    %172 = vmatpush1.bf16.msra.mxu0 %v151
    %173 = vmatprep.subr.bf16.mxu0 0
    %174 = vmatpush1.bf16.msra.mxu0 %v152
    %175 = vmatprep.subr.bf16.mxu0 0
    %176 = vmatpush1.bf16.msra.mxu0 %v153
    %177 = vmatprep.subr.bf16.mxu0 0
    %178 = vmatpush1.bf16.msra.mxu0 %v154
    %179 = vmatprep.subr.bf16.mxu0 0
    %180 = vmatpush1.bf16.msra.mxu0 0
    %181 = vmatprep.subr.bf16.mxu0 0
    %182 = vmatpush1.bf16.msra.mxu0 0
    %183 = vmatprep.subr.bf16.mxu0 0
    %184 = vmatpush1.bf16.msra.mxu0 0
    %185 = vmatprep.subr.bf16.mxu0 0
    %186 = vmatpush1.bf16.msra.mxu0 0
    %187 = vmatprep.subr.bf16.mxu0 0
    %188 = vmatpush1.bf16.msra.mxu0 0
    %189 = vmatprep.subr.bf16.mxu0 0
    %190 = vmatpush1.bf16.msra.mxu0 0
    %191 = vmatprep.subr.bf16.mxu0 0
    %192 = vmatpush1.bf16.msra.mxu0 0
    %193 = vmatprep.subr.bf16.mxu0 0
    %194 = vmatpush1.bf16.msra.mxu0 0
    %195 = vmatprep.mubr.bf16.mxu0 0
    %196 = vmatmul.mubr.bf16.gmra.mrb[0].mxu0 %v103
    %v197 = vpop.f32.mrb[0].mxu0
    %v198 = vadd.f32 %v77, %v197
    %v199 = vpop.f32.mrb[0].mxu0
    %v200 = vpop.f32.mrb[0].mxu0
    %v201 = vadd.f32 %v77, %v200
    %v202 = vpop.f32.mrb[0].mxu0
    %203 = vmatprep.mubr.bf16.mxu0 0
    %204 = vmatmul.mubr.bf16.gmra.mrb[0].mxu0 %v104
    %v205 = vpop.f32.mrb[0].mxu0
    %v206 = vadd.f32 %v77, %v205
    %v207 = vpop.f32.mrb[0].mxu0
    %v208 = vpop.f32.mrb[0].mxu0
    %v209 = vadd.f32 %v77, %v208
    %v210 = vpop.f32.mrb[0].mxu0
    %211 = vmatprep.mubr.bf16.mxu0 0
    %212 = vmatmul.mubr.bf16.gmra.mrb[0].mxu0 %v105
    %v213 = vpop.f32.mrb[0].mxu0
    %v214 = vadd.f32 %v77, %v213
    %v215 = vpop.f32.mrb[0].mxu0
    %v216 = vpop.f32.mrb[0].mxu0
    %v217 = vadd.f32 %v77, %v216
    %v218 = vpop.f32.mrb[0].mxu0
    %219 = vmatprep.mubr.bf16.mxu0 0
    %220 = vmatmul.mubr.bf16.gmra.mrb[0].mxu0 %v106
    %v221 = vpop.f32.mrb[0].mxu0
    %v222 = vadd.f32 %v77, %v221
    %v223 = vpop.f32.mrb[0].mxu0
    %v224 = vpop.f32.mrb[0].mxu0
    %v225 = vadd.f32 %v77, %v224
    %v226 = vpop.f32.mrb[0].mxu0
    %227 = vmatprep.mubr.bf16.mxu0 0
    %228 = vmatmul.mubr.bf16.gmra.mrb[0].mxu0 %v107
    %v229 = vpop.f32.mrb[0].mxu0
    %v230 = vadd.f32 %v77, %v229
    %v231 = vpop.f32.mrb[0].mxu0
    %v232 = vpop.f32.mrb[0].mxu0
    %v233 = vadd.f32 %v77, %v232
    %v234 = vpop.f32.mrb[0].mxu0
    %235 = vmatprep.mubr.bf16.mxu0 0
    %236 = vmatmul.mubr.bf16.gmra.mrb[0].mxu0 %v108
    %v237 = vpop.f32.mrb[0].mxu0
    %v238 = vadd.f32 %v77, %v237
    %v239 = vpop.f32.mrb[0].mxu0
    %v240 = vpop.f32.mrb[0].mxu0
    %v241 = vadd.f32 %v77, %v240
    %v242 = vpop.f32.mrb[0].mxu0
    %243 = vdwg.mxu0
    %244 = vst [vmem:[#allocation7] sm:$0xff] %v198
    %245 = vst [vmem:[#allocation7 + $0x8] sm:$0xff] %v201
    %246 = vst [vmem:[#allocation7 + $0x10] sm:$0xff] %v206
    %247 = vst [vmem:[#allocation7 + $0x18] sm:$0xff] %v209
    %248 = vst [vmem:[#allocation7 + $0x20] sm:$0xff] %v214
    %249 = vst [vmem:[#allocation7 + $0x28] sm:$0xff] %v217
    %250 = vst [vmem:[#allocation7 + $0x30] sm:$0xff] %v222
    %251 = vst [vmem:[#allocation7 + $0x38] sm:$0xff] %v225
    %252 = vst [vmem:[#allocation7 + $0x40] sm:$0xff] %v230
    %253 = vst [vmem:[#allocation7 + $0x48] sm:$0xff] %v233
    %254 = vst [vmem:[#allocation7 + $0x50] sm:$0xff] %v238
    %255 = vst [vmem:[#allocation7 + $0x58] sm:$0xff] %v241
    // Predicated region
    $region22: #{tpu_custom_call.1} parent=1 // pred_check
      _
    $region23: #{tpu_custom_call.1} parent=1 // pred_check_branch
      %257 = sbr.rel (0) target = $region25
    $region24: #{tpu_custom_call.1} parent=1 // pred_region
      %s259 = ssub.s32 1536, 1536
      %260 = vsyncadd [#allocation4], %s259
      %s261 = sshll.u32 [#allocation7], 4
      %s262 = int_to_ptr.vmem [resolvable:$true] %s261
      %267 = dma.vmem_to_hbm [thread:$0]  %s262, 1536, %s3, [#allocation4], 128, 128, 8
    $region25: #{tpu_custom_call.1} parent=1 // pred_fallthru
      _
    // Predicated region
    $region26: #{tpu_custom_call.1} parent=1 // pred_check
      _
    $region27: #{tpu_custom_call.1} parent=1 // pred_check_branch
      %269 = sbr.rel (0) target = $region29
    $region28: #{tpu_custom_call.1} parent=1 // pred_region
      %270 = dma.done [#allocation4], 1536
    $region29: #{tpu_custom_call.1} parent=1 // pred_fallthru
      _
    %271 = vsyncpa [#allocation3], 1
    %272 = vsyncpa [#allocation6], 1
    %273 = vsyncpa [#allocation4], 1

</llo_original>
